<compile_context>
chip_gen: v7x
topology: tpu7x:2x2x1
jax: 0.10.0
libtpu: 0.0.40
codegen_flags: <defaults>
</compile_context>

<pallas_src>
import jax
import jax.numpy as jnp
import numpy as np
from jax.experimental import pallas as pl
from jax.experimental.pallas import tpu as pltpu


def _embedding_kernel(z_ref, w1c_ref, b1c_ref, w2_ref, b2_ref, o_ref):
    """One grid step = hidden-row p of the hypernet, batched over all h*k z's.

    z_ref   : (n, z_dim)          all embedding z-vectors (VMEM-resident)
    w1c_ref : (1, z_dim, z_dim)   W1 columns for hidden row p
    b1c_ref : (1, 1, z_dim)       b1 slice for hidden row p
    w2_ref  : (z_dim, Mp)         second Linear weight (lane-padded, resident)
    b2_ref  : (1, Mp)             second Linear bias   (lane-padded, resident)
    o_ref   : (1, n, Mp)          h_final rows for hidden index p, all tiles
    """
    # First Linear (restricted to hidden row p), batched over all n tiles.
    h_in = jnp.dot(z_ref[...], w1c_ref[0],
                   preferred_element_type=jnp.float32) + b1c_ref[0]      # (n, z_dim)
    # Second Linear, batched over all n tiles. Bias broadcast happens once.
    h_fin = jnp.dot(h_in, w2_ref[...],
                    preferred_element_type=jnp.float32) + b2_ref[...]    # (n, Mp)
    o_ref[0] = h_fin.astype(o_ref.dtype)


def embedding_forward(zs, w1, b1, w2, b2, z_num, in_size, out_size, f_size):
    """Pallas forward of Embedding.forward(hyper_net) with the fused HyperNetwork.

    zs : (h*k, z_dim)            stacked z_list (order i*k + j)
    w1 : (z_dim, in_size*z_dim)  hypernet first Linear
    b1 : (in_size*z_dim,)
    w2 : (z_dim, out_size*f*f)   hypernet second Linear
    b2 : (out_size*f*f,)
    returns (h*out_size, k*in_size, f, f)
    """
    h, k = z_num
    n, z_dim = zs.shape
    assert n == h * k
    m = out_size * f_size * f_size
    assert w1.shape == (z_dim, in_size * z_dim)
    assert b1.shape == (in_size * z_dim,)
    assert w2.shape == (z_dim, m)
    assert b2.shape == (m,)

    # Lane-dense output: pad the hypernet output width to a multiple of 128.
    mp = ((m + 127) // 128) * 128

    # Glue (pure layout, no compute): regroup W1/b1 by hidden row p so the
    # kernel never reshapes.  w1c[p, d, q] = w1[d, p*z_dim + q].
    w1c = jnp.transpose(w1.reshape(z_dim, in_size, z_dim), (1, 0, 2))   # (in_size, z_dim, z_dim)
    b1c = b1.reshape(in_size, 1, z_dim)                                 # (in_size, 1, z_dim)
    w2p = jnp.pad(w2, ((0, 0), (0, mp - m)))                            # (z_dim, Mp)
    b2p = jnp.pad(b2, (0, mp - m)).reshape(1, mp)                       # (1, Mp)

    out = pl.pallas_call(
        _embedding_kernel,
        out_shape=jax.ShapeDtypeStruct((in_size, n, mp), zs.dtype),
        grid=(in_size,),
        in_specs=[
            pl.BlockSpec((n, z_dim), lambda p: (0, 0)),            # zs   (resident)
            pl.BlockSpec((1, z_dim, z_dim), lambda p: (p, 0, 0)),  # w1c  (streamed per p)
            pl.BlockSpec((1, 1, z_dim), lambda p: (p, 0, 0)),      # b1c  (streamed per p)
            pl.BlockSpec((z_dim, mp), lambda p: (0, 0)),           # w2   (resident)
            pl.BlockSpec((1, mp), lambda p: (0, 0)),               # b2   (resident)
        ],
        out_specs=pl.BlockSpec((1, n, mp), lambda p: (p, 0, 0)),
        compiler_params=pltpu.CompilerParams(
            dimension_semantics=("parallel",)),
    )(zs, w1c, b1c, w2p, b2p)

    # Drop lane padding, then reproduce the exact torch.view + torch.cat block
    # assembly (pure index relabeling, done in the wrapper).
    out = out[:, :, :m]                                   # (in_size, n, m)
    out = jnp.transpose(out, (1, 0, 2))                   # (n, in_size, m)  == per-tile h_final
    out = out.reshape(h, k, out_size, in_size, f_size, f_size)   # per-tile .view(out,in,f,f)
    out = jnp.transpose(out, (0, 2, 1, 3, 4, 5))          # (h, out, k, in, f, f)
    return out.reshape(h * out_size, k * in_size, f_size, f_size)


def ref_forward(zs, w1, b1, w2, b2, z_num, in_size, out_size, f_size):
    """Pure-JAX reference mirroring the PyTorch module loop-for-loop."""
    hh, kk = z_num
    rows = []
    for i in range(hh):
        tiles = []
        for j in range(kk):
            z = zs[i * kk + j]
            h_in = (jnp.dot(z, w1, precision=jax.lax.Precision.HIGHEST) + b1
                    ).reshape(in_size, -1)
            h_fin = jnp.dot(h_in, w2, precision=jax.lax.Precision.HIGHEST) + b2
            tiles.append(h_fin.reshape(out_size, in_size, f_size, f_size))
        rows.append(jnp.concatenate(tiles, axis=1))   # torch.cat(w, dim=1)
    return jnp.concatenate(rows, axis=0)              # torch.cat(ww, dim=0)


if __name__ == "__main__":
    # Small shapes consistent with the module.
    z_num = (2, 3)            # h x k grid of embedding slots
    z_dim = 64
    in_size, out_size, f_size = 8, 8, 3
    h, k = z_num
    m = out_size * f_size * f_size

    key = jax.random.PRNGKey(0)
    kz, k1, k2, k3, k4 = jax.random.split(key, 5)
    # z_list: torch.fmod(torch.randn(z_dim), 2) per slot, stacked in i*k+j order.
    zs = jnp.fmod(jax.random.normal(kz, (h * k, z_dim), jnp.float32), 2.0)
    # Canonical two-Linear HyperNetwork parameters (deterministic synthetic).
    w1 = 0.1 * jnp.fmod(jax.random.normal(k1, (z_dim, in_size * z_dim), jnp.float32), 2.0)
    b1 = 0.1 * jnp.fmod(jax.random.normal(k2, (in_size * z_dim,), jnp.float32), 2.0)
    w2 = 0.1 * jnp.fmod(jax.random.normal(k3, (z_dim, m), jnp.float32), 2.0)
    b2 = 0.1 * jnp.fmod(jax.random.normal(k4, (m,), jnp.float32), 2.0)

    out = jax.block_until_ready(
        embedding_forward(zs, w1, b1, w2, b2, z_num, in_size, out_size, f_size))

    ref = ref_forward(zs, w1, b1, w2, b2, z_num, in_size, out_size, f_size)
    assert out.shape == (h * out_size, k * in_size, f_size, f_size)
    np.testing.assert_allclose(np.asarray(out), np.asarray(ref), atol=1e-4, rtol=1e-4)
    print("KERNEL_OK")
</pallas_src>

<mosaic_0001>
module attributes {stable_mosaic.version = 11 : i64} {
  func.func @_embedding_kernel(%arg0: i32, %arg1: memref<6x64xf32, #tpu.memory_space<vmem>>, %arg2: memref<1x64x64xf32, #tpu.memory_space<vmem>>, %arg3: memref<1x1x64xf32, #tpu.memory_space<vmem>>, %arg4: memref<64x128xf32, #tpu.memory_space<vmem>>, %arg5: memref<1x128xf32, #tpu.memory_space<vmem>>, %arg6: memref<1x6x128xf32, #tpu.memory_space<vmem>>) attributes {dimension_semantics = [#tpu.dimension_semantics<parallel>], iteration_bounds = array<i64: 8>, scalar_prefetch = 0 : i64, scratch_operands = 0 : i64, tpu.core_type = #tpu.core_type<tc>, window_params = [{pipeline_mode = #tpu.pipeline_mode<synchronous>, transform_indices = @transform_0, window_bounds = array<i64: 6, 64>}, {transform_indices = @transform_1, window_bounds = array<i64: 1, 64, 64>}, {transform_indices = @transform_2, window_bounds = array<i64: 1, 1, 64>}, {pipeline_mode = #tpu.pipeline_mode<synchronous>, transform_indices = @transform_3, window_bounds = array<i64: 64, 128>}, {pipeline_mode = #tpu.pipeline_mode<synchronous>, transform_indices = @transform_4, window_bounds = array<i64: 1, 128>}, {transform_indices = @transform_5, window_bounds = array<i64: 1, 6, 128>}]} {
    %c0 = arith.constant 0 : index
    %c0_0 = arith.constant 0 : index
    %0 = vector.load %arg1[%c0, %c0_0] : memref<6x64xf32, #tpu.memory_space<vmem>>, vector<6x64xf32>
    %c0_1 = arith.constant 0 : index
    %c0_2 = arith.constant 0 : index
    %c0_3 = arith.constant 0 : index
    %1 = vector.load %arg2[%c0_1, %c0_2, %c0_3] : memref<1x64x64xf32, #tpu.memory_space<vmem>>, vector<1x64x64xf32>
    %2 = vector.shape_cast %1 : vector<1x64x64xf32> to vector<64x64xf32>
    %cst = arith.constant dense<0.000000e+00> : vector<6x64xf32>
    %3 = tpu.matmul %0, %2, %cst {dimension_numbers = #tpu.dot_dimension_numbers<[1], [0], [0], [1], [0, 0, 1, 1], [], []>} : vector<6x64xf32>, vector<64x64xf32>, vector<6x64xf32> -> vector<6x64xf32>
    %c0_4 = arith.constant 0 : index
    %c0_5 = arith.constant 0 : index
    %c0_6 = arith.constant 0 : index
    %4 = vector.load %arg3[%c0_4, %c0_5, %c0_6] : memref<1x1x64xf32, #tpu.memory_space<vmem>>, vector<1x1x64xf32>
    %5 = vector.shape_cast %4 : vector<1x1x64xf32> to vector<1x64xf32>
    %6 = vector.broadcast %5 : vector<1x64xf32> to vector<6x64xf32>
    %7 = arith.addf %3, %6 : vector<6x64xf32>
    %c0_7 = arith.constant 0 : index
    %c0_8 = arith.constant 0 : index
    %8 = vector.load %arg4[%c0_7, %c0_8] : memref<64x128xf32, #tpu.memory_space<vmem>>, vector<64x128xf32>
    %cst_9 = arith.constant dense<0.000000e+00> : vector<6x128xf32>
    %9 = tpu.matmul %7, %8, %cst_9 {dimension_numbers = #tpu.dot_dimension_numbers<[1], [0], [0], [1], [0, 0, 1, 1], [], []>} : vector<6x64xf32>, vector<64x128xf32>, vector<6x128xf32> -> vector<6x128xf32>
    %c0_10 = arith.constant 0 : index
    %c0_11 = arith.constant 0 : index
    %10 = vector.load %arg5[%c0_10, %c0_11] : memref<1x128xf32, #tpu.memory_space<vmem>>, vector<1x128xf32>
    %11 = vector.broadcast %10 : vector<1x128xf32> to vector<6x128xf32>
    %12 = arith.addf %9, %11 : vector<6x128xf32>
    %c0_12 = arith.constant 0 : index
    %c0_13 = arith.constant 0 : index
    %c0_14 = arith.constant 0 : index
    %13 = vector.load %arg6[%c0_12, %c0_13, %c0_14] : memref<1x6x128xf32, #tpu.memory_space<vmem>>, vector<1x6x128xf32>
    %14 = vector.shape_cast %13 : vector<1x6x128xf32> to vector<6x128xf32>
    %15 = vector.shape_cast %12 : vector<6x128xf32> to vector<1x6x128xf32>
    tpu.vector_store %arg6[%c0_12, %c0_13, %c0_14], %15 {strides = array<i32>} : memref<1x6x128xf32, #tpu.memory_space<vmem>>, vector<1x6x128xf32>,
    return
  }
  func.func @transform_0(%arg0: i32) -> (i32, i32) {
    %c0_i32 = arith.constant 0 : i32
    %c0_i32_0 = arith.constant 0 : i32
    %c0_i32_1 = arith.constant 0 : i32
    return %c0_i32, %c0_i32_0 : i32, i32
  }
  func.func @transform_1(%arg0: i32) -> (i32, i32, i32) {
    %c0_i32 = arith.constant 0 : i32
    %c0_i32_0 = arith.constant 0 : i32
    %c0_i32_1 = arith.constant 0 : i32
    return %arg0, %c0_i32, %c0_i32_0 : i32, i32, i32
  }
  func.func @transform_2(%arg0: i32) -> (i32, i32, i32) {
    %c0_i32 = arith.constant 0 : i32
    %c0_i32_0 = arith.constant 0 : i32
    %c0_i32_1 = arith.constant 0 : i32
    return %arg0, %c0_i32, %c0_i32_0 : i32, i32, i32
  }
  func.func @transform_3(%arg0: i32) -> (i32, i32) {
    %c0_i32 = arith.constant 0 : i32
    %c0_i32_0 = arith.constant 0 : i32
    %c0_i32_1 = arith.constant 0 : i32
    return %c0_i32, %c0_i32_0 : i32, i32
  }
  func.func @transform_4(%arg0: i32) -> (i32, i32) {
    %c0_i32 = arith.constant 0 : i32
    %c0_i32_0 = arith.constant 0 : i32
    %c0_i32_1 = arith.constant 0 : i32
    return %c0_i32, %c0_i32_0 : i32, i32
  }
  func.func @transform_5(%arg0: i32) -> (i32, i32, i32) {
    %c0_i32 = arith.constant 0 : i32
    %c0_i32_0 = arith.constant 0 : i32
    %c0_i32_1 = arith.constant 0 : i32
    return %arg0, %c0_i32, %c0_i32_0 : i32, i32, i32
  }
}

</mosaic_0001>

<llo_original>
// kernel: tpu_custom_call.1
$region0: #{tpu_custom_call.1}
  #allocation0 [shape = 'u32[]', space=smem, size = 0x4, offset = 0x4, fixed_abs, tag = 'smem constant byte address 0x4 - core index']
  #allocation1 [shape = 'u32[144,128]{1,0:T(1,128)}', space=vmem, size = 0x12000, scoped, tag = 'internal scratch']
  %s0 = inlined_call_operand.hbm [shape: f32[6,64], index: 0, kind: input, shape index: {}]
  %s1 = inlined_call_operand.hbm [shape: f32[8,64,64], index: 1, kind: input, shape index: {}]
  %s2 = inlined_call_operand.hbm [shape: f32[8,1,64], index: 2, kind: input, shape index: {}]
  %s3 = inlined_call_operand.hbm [shape: f32[64,128], index: 3, kind: input, shape index: {}]
  %s4 = inlined_call_operand.vmem [shape: f32[1,128], index: 4, kind: input, shape index: {}]
  %s5 = inlined_call_operand.vmem [shape: f32[8,6,128], index: 5, kind: output, shape index: {}]
  %s6 = sld [smem:[#allocation0]]
  $region69: #{tpu_custom_call.1} parent=0
    _
  %s8 = ssub.s32 1, %s6
  %s9 = scalar_select 0, %s8, %s6
  $region1: #{tpu_custom_call.1} parent=0
    #allocation2 [shape = 'u8[4096]{0}', space=vmem, size = 0x1000, scoped, tag = 'input window, operand 0, single buffered']
    #allocation3 [shape = 's32[2]{0}', space=sflag, size = 0x8, scoped, tag = 'scoped memory for tpu_custom_call.1']
    #allocation4 [shape = 'u8[65536]{0}', space=vmem, size = 0x10000, scoped, tag = 'input window, operand 1']
    #allocation5 [shape = 's32[2]{0}', space=sflag, size = 0x8, scoped, tag = 'scoped memory for tpu_custom_call.1']
    #allocation6 [shape = 'u8[1024]{0}', space=vmem, size = 0x400, scoped, tag = 'input window, operand 2']
    #allocation7 [shape = 'u8[32768]{0}', space=vmem, size = 0x8000, scoped, tag = 'input window, operand 3, single buffered']
    #allocation8 [shape = 's32[1]{0}', space=sflag, size = 0x4, scoped, tag = 'scoped memory for tpu_custom_call.1']
    %10 = vsyncpa [#allocation3], 0
    %11 = vsyncpa [#allocation5], 0
    %s12 = scalar_lea.sflag [#allocation5], 1
    %13 = vsyncpa %s12, 0
    %14 = vsyncpa [#allocation8], 0
    loop: start=0, step=1, limit=10
    $region2: #{tpu_custom_call.1} parent=1 // loop_pre_header
      _
    $region3: #{tpu_custom_call.1} parent=1 // loop_header
      %s16 = sphi 0, %s20
      %p17 = scmp.ge.s32.totalorder %s16, 10
      %s24 = sphi 0, %s24
      %s26 = sphi 0, %s24
      %s27 = sphi 0, %s26
      %s41 = sphi 0, %s27
      %s47 = sphi 0, %s49
      %s50 = sphi 0, %s47
      %s51 = sphi 0, %s50
      %s67 = sphi 0, %s51
      %s73 = sphi 0, %s75
      %s76 = sphi 0, %s73
      %s77 = sphi 0, %s76
      %s93 = sphi 0, %s77
      %s97 = sphi 0, %s97
      %s99 = sphi 0, %s97
      %s100 = sphi 0, %s99
      %s114 = sphi 0, %s100
      %s118 = sphi 0, %s118
      %s120 = sphi 0, %s118
      %s121 = sphi 0, %s120
      %s135 = sphi 0, %s121
      %s141 = sphi 0, %s143
      %s144 = sphi 0, %s141
      %s145 = sphi 0, %s144
      %s161 = sphi 0, %s145
    $region4: #{tpu_custom_call.1} parent=1 // loop_header_branch
      %19 = sbr.rel (%p17) target = $region8
    $region5: #{tpu_custom_call.1} parent=1 // loop_body
      %s21 = ssub.s32 %s16, 1
      %s22 = ssub.s32 %s16, 2
      %s23 = sadd.s32 %s16, 1
      %s25 = sadd.s32 %s24, 1
      %p28 = scmp.eq.s32.totalorder %s16, 7
      %p29 = scmp.ne.s32.totalorder %s24, %s26
      %p30 = scmp.eq.s32.totalorder %s16, 0
      %p31 = por %p29, %p30
      %p32 = scmp.ne.s32.totalorder %s24, %s26
      %p33 = scmp.eq.s32.totalorder %s21, 7
      %p34 = por %p32, %p33
      %p35 = scmp.ne.s32.totalorder %s26, %s27
      %p36 = scmp.eq.s32.totalorder %s21, 0
      %p37 = por %p35, %p36
      %p38 = scmp.ne.s32.totalorder %s26, %s27
      %p39 = scmp.eq.s32.totalorder %s22, 7
      %p40 = por %p38, %p39
      %p42 = scmp.ne.s32.totalorder %s27, %s41
      %p43 = scmp.eq.s32.totalorder %s22, 0
      %p44 = por %p42, %p43
      %s45 = ssub.s32 %s16, %s23
      %p46 = scmp.eq.s32.totalorder %s45, 0
      %s48 = sadd.s32 %s47, 1
      %s49 = scalar_select %p46, %s47, %s48
      %p52 = pneg %p46
      %p53 = scmp.eq.s32.totalorder %s16, 7
      %p54 = por %p52, %p53
      %p55 = scmp.ne.s32.totalorder %s47, %s50
      %p56 = scmp.eq.s32.totalorder %s16, 0
      %p57 = por %p55, %p56
      %p58 = scmp.ne.s32.totalorder %s47, %s50
      %p59 = scmp.eq.s32.totalorder %s21, 7
      %p60 = por %p58, %p59
      %p61 = scmp.ne.s32.totalorder %s50, %s51
      %p62 = scmp.eq.s32.totalorder %s21, 0
      %p63 = por %p61, %p62
      %p64 = scmp.ne.s32.totalorder %s50, %s51
      %p65 = scmp.eq.s32.totalorder %s22, 7
      %p66 = por %p64, %p65
      %p68 = scmp.ne.s32.totalorder %s51, %s67
      %p69 = scmp.eq.s32.totalorder %s22, 0
      %p70 = por %p68, %p69
      %s71 = ssub.s32 %s16, %s23
      %p72 = scmp.eq.s32.totalorder %s71, 0
      %s74 = sadd.s32 %s73, 1
      %s75 = scalar_select %p72, %s73, %s74
      %p78 = pneg %p72
      %p79 = scmp.eq.s32.totalorder %s16, 7
      %p80 = por %p78, %p79
      %p81 = scmp.ne.s32.totalorder %s73, %s76
      %p82 = scmp.eq.s32.totalorder %s16, 0
      %p83 = por %p81, %p82
      %p84 = scmp.ne.s32.totalorder %s73, %s76
      %p85 = scmp.eq.s32.totalorder %s21, 7
      %p86 = por %p84, %p85
      %p87 = scmp.ne.s32.totalorder %s76, %s77
      %p88 = scmp.eq.s32.totalorder %s21, 0
      %p89 = por %p87, %p88
      %p90 = scmp.ne.s32.totalorder %s76, %s77
      %p91 = scmp.eq.s32.totalorder %s22, 7
      %p92 = por %p90, %p91
      %p94 = scmp.ne.s32.totalorder %s77, %s93
      %p95 = scmp.eq.s32.totalorder %s22, 0
      %p96 = por %p94, %p95
      %s98 = sadd.s32 %s97, 1
      %p101 = scmp.eq.s32.totalorder %s16, 7
      %p102 = scmp.ne.s32.totalorder %s97, %s99
      %p103 = scmp.eq.s32.totalorder %s16, 0
      %p104 = por %p102, %p103
      %p105 = scmp.ne.s32.totalorder %s97, %s99
      %p106 = scmp.eq.s32.totalorder %s21, 7
      %p107 = por %p105, %p106
      %p108 = scmp.ne.s32.totalorder %s99, %s100
      %p109 = scmp.eq.s32.totalorder %s21, 0
      %p110 = por %p108, %p109
      %p111 = scmp.ne.s32.totalorder %s99, %s100
      %p112 = scmp.eq.s32.totalorder %s22, 7
      %p113 = por %p111, %p112
      %p115 = scmp.ne.s32.totalorder %s100, %s114
      %p116 = scmp.eq.s32.totalorder %s22, 0
      %p117 = por %p115, %p116
      %s119 = sadd.s32 %s118, 1
      %p122 = scmp.eq.s32.totalorder %s16, 7
      %p123 = scmp.ne.s32.totalorder %s118, %s120
      %p124 = scmp.eq.s32.totalorder %s16, 0
      %p125 = por %p123, %p124
      %p126 = scmp.ne.s32.totalorder %s118, %s120
      %p127 = scmp.eq.s32.totalorder %s21, 7
      %p128 = por %p126, %p127
      %p129 = scmp.ne.s32.totalorder %s120, %s121
      %p130 = scmp.eq.s32.totalorder %s21, 0
      %p131 = por %p129, %p130
      %p132 = scmp.ne.s32.totalorder %s120, %s121
      %p133 = scmp.eq.s32.totalorder %s22, 7
      %p134 = por %p132, %p133
      %p136 = scmp.ne.s32.totalorder %s121, %s135
      %p137 = scmp.eq.s32.totalorder %s22, 0
      %p138 = por %p136, %p137
      %s139 = ssub.s32 %s16, %s23
      %p140 = scmp.eq.s32.totalorder %s139, 0
      %s142 = sadd.s32 %s141, 1
      %s143 = scalar_select %p140, %s141, %s142
      %p146 = pneg %p140
      %p147 = scmp.eq.s32.totalorder %s16, 7
      %p148 = por %p146, %p147
      %p149 = scmp.ne.s32.totalorder %s141, %s144
      %p150 = scmp.eq.s32.totalorder %s16, 0
      %p151 = por %p149, %p150
      %p152 = scmp.ne.s32.totalorder %s141, %s144
      %p153 = scmp.eq.s32.totalorder %s21, 7
      %p154 = por %p152, %p153
      %p155 = scmp.ne.s32.totalorder %s144, %s145
      %p156 = scmp.eq.s32.totalorder %s21, 0
      %p157 = por %p155, %p156
      %p158 = scmp.ne.s32.totalorder %s144, %s145
      %p159 = scmp.eq.s32.totalorder %s22, 7
      %p160 = por %p158, %p159
      %p162 = scmp.ne.s32.totalorder %s145, %s161
      %p163 = scmp.eq.s32.totalorder %s22, 0
      %p164 = por %p162, %p163
      %p165 = scmp.le.s32.totalorder 1, %s16
      %p166 = scmp.lt.s32.totalorder %s16, 9
      %p167 = pnand %p165, %p166
      %p168 = pneg %p167
      // Predicated region
      $region9: #{tpu_custom_call.1} parent=5 // pred_check
        _
      $region10: #{tpu_custom_call.1} parent=5 // pred_check_branch
        %170 = sbr.rel (%p167) target = $region12
      $region11: #{tpu_custom_call.1} parent=5 // pred_region
        %s171 = ssub.s32 %s16, 1
        // Predicated region
        $region13: #{tpu_custom_call.1} parent=11 // pred_check
          %p172 = pneg %p37
        $region14: #{tpu_custom_call.1} parent=11 // pred_check_branch
          %174 = sbr.rel (%p172) target = $region16
        $region15: #{tpu_custom_call.1} parent=11 // pred_region
          %s176 = ssub.s32 128, 128
          %177 = vsyncadd [#allocation3], %s176
          %s179 = sshll.u32 [#allocation2], 4
          %s180 = int_to_ptr.vmem [resolvable:$true] %s179
          %182 = dma.hbm_to_vmem [thread:$0]  %s0, 128, %s180, [#allocation3]
        $region16: #{tpu_custom_call.1} parent=11 // pred_fallthru
          _
        // Predicated region
        $region17: #{tpu_custom_call.1} parent=11 // pred_check
          %p183 = pneg %p110
        $region18: #{tpu_custom_call.1} parent=11 // pred_check_branch
          %185 = sbr.rel (%p183) target = $region20
        $region19: #{tpu_custom_call.1} parent=11 // pred_region
          %s187 = ssub.s32 1024, 1024
          %188 = vsyncadd [#allocation8], %s187
          %s189 = sshll.u32 [#allocation7], 4
          %s190 = int_to_ptr.vmem [resolvable:$true] %s189
          %195 = dma.hbm_to_vmem [thread:$0]  %s3, 1024, %s190, [#allocation8], 128, 128, 8
        $region20: #{tpu_custom_call.1} parent=11 // pred_fallthru
          _
        // Predicated region
        $region21: #{tpu_custom_call.1} parent=11 // pred_check
          %p196 = pneg %p131
        $region22: #{tpu_custom_call.1} parent=11 // pred_check_branch
          %198 = sbr.rel (%p196) target = $region24
        $region23: #{tpu_custom_call.1} parent=11 // pred_region
          _
        $region24: #{tpu_custom_call.1} parent=11 // pred_fallthru
          _
      $region12: #{tpu_custom_call.1} parent=5 // pred_fallthru
        _
      %p199 = scmp.lt.s32.totalorder %s16, 8
      // Predicated region
      $region25: #{tpu_custom_call.1} parent=5 // pred_check
        %p200 = pneg %p199
      $region26: #{tpu_custom_call.1} parent=5 // pred_check_branch
        %202 = sbr.rel (%p200) target = $region28
      $region27: #{tpu_custom_call.1} parent=5 // pred_region
        // Predicated region
        $region29: #{tpu_custom_call.1} parent=27 // pred_check
          %p203 = pneg %p57
        $region30: #{tpu_custom_call.1} parent=27 // pred_check_branch
          %205 = sbr.rel (%p203) target = $region32
        $region31: #{tpu_custom_call.1} parent=27 // pred_region
          %s206 = sand.u32 %s16, 1
          %s207 = scalar_lea.sflag [#allocation5], %s206
          %s208 = sand.u32 %s47, 1
          %s209 = smul.addr %s208, 64
          %s210 = scalar_lea.vmem [#allocation4], %s209
          %s212 = ssub.s32 1024, 1024
          %213 = vsyncadd %s207, %s212
          %s214 = smul.addr %s16, 8
          %s215 = smul.addr %s214, 128
          %s216 = scalar_lea.hbm %s1, %s215
          %s217 = sshll.u32 %s210, 4
          %s218 = int_to_ptr.vmem [resolvable:$true] %s217
          %223 = dma.hbm_to_vmem [thread:$0]  %s216, 1024, %s218, %s207, 128, 128, 8
        $region32: #{tpu_custom_call.1} parent=27 // pred_fallthru
          _
        // Predicated region
        $region33: #{tpu_custom_call.1} parent=27 // pred_check
          %p224 = pneg %p83
        $region34: #{tpu_custom_call.1} parent=27 // pred_check_branch
          %226 = sbr.rel (%p224) target = $region36
        $region35: #{tpu_custom_call.1} parent=27 // pred_region
          %s227 = sand.u32 %s16, 1
          %s228 = scalar_lea.sflag [#allocation5], %s227
          %s229 = sand.u32 %s73, 1
          %s230 = scalar_lea.vmem [#allocation6], %s229
          %s232 = ssub.s32 16, 16
          %233 = vsyncadd %s228, %s232
          %s234 = smul.addr %s16, 16
          %s235 = scalar_lea.hbm %s2, %s234
          %s237 = sshll.u32 %s230, 4
          %s238 = int_to_ptr.vmem [resolvable:$true] %s237
          %240 = dma.hbm_to_vmem [thread:$0]  %s235, 16, %s238, %s228
        $region36: #{tpu_custom_call.1} parent=27 // pred_fallthru
          _
      $region28: #{tpu_custom_call.1} parent=5 // pred_fallthru
        _
      %p241 = scmp.le.s32.totalorder 1, %s16
      %p242 = scmp.lt.s32.totalorder %s16, 9
      %p243 = pnand %p241, %p242
      %p244 = pneg %p243
      // Predicated region
      $region37: #{tpu_custom_call.1} parent=5 // pred_check
        _
      $region38: #{tpu_custom_call.1} parent=5 // pred_check_branch
        %246 = sbr.rel (%p243) target = $region40
      $region39: #{tpu_custom_call.1} parent=5 // pred_region
        %s247 = ssub.s32 %s16, 1
        // Predicated region
        $region41: #{tpu_custom_call.1} parent=39 // pred_check
          %p248 = pneg %p37
        $region42: #{tpu_custom_call.1} parent=39 // pred_check_branch
          %250 = sbr.rel (%p248) target = $region44
        $region43: #{tpu_custom_call.1} parent=39 // pred_region
          %251 = dma.done [#allocation3], 128
        $region44: #{tpu_custom_call.1} parent=39 // pred_fallthru
          _
        %s252 = sand.u32 %s21, 1
        %s253 = scalar_lea.sflag [#allocation5], %s252
        %s254 = sand.u32 %s50, 1
        %s255 = smul.addr %s254, 64
        %s256 = scalar_lea.vmem [#allocation4], %s255
        // Predicated region
        $region45: #{tpu_custom_call.1} parent=39 // pred_check
          %p257 = pneg %p63
        $region46: #{tpu_custom_call.1} parent=39 // pred_check_branch
          %259 = sbr.rel (%p257) target = $region48
        $region47: #{tpu_custom_call.1} parent=39 // pred_region
          %260 = dma.done %s253, 1024
        $region48: #{tpu_custom_call.1} parent=39 // pred_fallthru
          _
        %s261 = sand.u32 %s21, 1
        %s262 = scalar_lea.sflag [#allocation5], %s261
        %s263 = sand.u32 %s76, 1
        %s264 = scalar_lea.vmem [#allocation6], %s263
        // Predicated region
        $region49: #{tpu_custom_call.1} parent=39 // pred_check
          %p265 = pneg %p89
        $region50: #{tpu_custom_call.1} parent=39 // pred_check_branch
          %267 = sbr.rel (%p265) target = $region52
        $region51: #{tpu_custom_call.1} parent=39 // pred_region
          %268 = dma.done %s262, 16
        $region52: #{tpu_custom_call.1} parent=39 // pred_fallthru
          _
        // Predicated region
        $region53: #{tpu_custom_call.1} parent=39 // pred_check
          %p269 = pneg %p110
        $region54: #{tpu_custom_call.1} parent=39 // pred_check_branch
          %271 = sbr.rel (%p269) target = $region56
        $region55: #{tpu_custom_call.1} parent=39 // pred_region
          %272 = dma.done [#allocation8], 1024
        $region56: #{tpu_custom_call.1} parent=39 // pred_fallthru
          _
        %p273 = pneg %p37
        %p274 = pneg %p34
        %s275 = sand.u32 %s21, 1
        %s276 = scalar_lea.sflag [#allocation5], %s275
        %s277 = sand.u32 %s50, 1
        %s278 = smul.addr %s277, 64
        %s279 = scalar_lea.vmem [#allocation4], %s278
        %p280 = pneg %p63
        %p281 = pneg %p60
        %s282 = sand.u32 %s21, 1
        %s283 = scalar_lea.sflag [#allocation5], %s282
        %s284 = sand.u32 %s76, 1
        %s285 = scalar_lea.vmem [#allocation6], %s284
        %p286 = pneg %p89
        %p287 = pneg %p86
        %p288 = pneg %p110
        %p289 = pneg %p107
        %p290 = pneg %p131
        %p291 = pneg %p128
        %p292 = pneg %p157
        %p293 = pneg %p154
        %p294 = scmp.lt.s32.totalorder %s21, 7
        %s295 = scalar_select %p294, %s21, 7
        %s296 = smul.addr %s295, 8
        %s297 = scalar_lea.vmem %s5, %s296
        %p298 = scmp.lt.s32.totalorder %s21, 7
        %s299 = scalar_select %p298, %s21, 7
        %s300 = smul.addr %s299, 8
        %s301 = scalar_lea.vmem %s5, %s300
        %v302 = vld [vmem:[#allocation2] sm:$0x3f]
        %v303 = vld [vmem:[%s256] sm:$0xff]
        %v304 = vld [vmem:[%s256 + $0x8] sm:$0xff]
        %v305 = vld [vmem:[%s256 + $0x10] sm:$0xff]
        %v306 = vld [vmem:[%s256 + $0x18] sm:$0xff]
        %v307 = vld [vmem:[%s256 + $0x20] sm:$0xff]
        %v308 = vld [vmem:[%s256 + $0x28] sm:$0xff]
        %v309 = vld [vmem:[%s256 + $0x30] sm:$0xff]
        %v310 = vld [vmem:[%s256 + $0x38] sm:$0xff]
        %v311 = vld [vmem:[%s264] sm:$0x1]
        %v313 = vlaneseq
        %v314 = vshrl.u32 %v313, 7
        %v315 = vsub.s32 0, %v314
        %v316 = vrot.slane %v311, %v315
        %vm318 = vcmask 523264
        %v320 = vsel %vm318, %v302, 0
        %322 = vmatprep.subr.mxu0 0.0
        %323 = vmatpush1.msra.mxu0 %v303
        %324 = vmatprep.subr.mxu0 0.0
        %325 = vmatpush1.msra.mxu0 %v304
        %326 = vmatprep.subr.mxu0 0.0
        %327 = vmatpush1.msra.mxu0 %v305
        %328 = vmatprep.subr.mxu0 0.0
        %329 = vmatpush1.msra.mxu0 %v306
        %330 = vmatprep.subr.mxu0 0.0
        %331 = vmatpush1.msra.mxu0 %v307
        %332 = vmatprep.subr.mxu0 0.0
        %333 = vmatpush1.msra.mxu0 %v308
        %334 = vmatprep.subr.mxu0 0.0
        %335 = vmatpush1.msra.mxu0 %v309
        %336 = vmatprep.subr.mxu0 0.0
        %337 = vmatpush1.msra.mxu0 %v310
        %338 = vmatprep.subr.mxu0 0.0
        %339 = vmatpush1.msra.mxu0 0.0
        %340 = vmatprep.subr.mxu0 0.0
        %341 = vmatpush1.msra.mxu0 0.0
        %342 = vmatprep.subr.mxu0 0.0
        %343 = vmatpush1.msra.mxu0 0.0
        %344 = vmatprep.subr.mxu0 0.0
        %345 = vmatpush1.msra.mxu0 0.0
        %346 = vmatprep.subr.mxu0 0.0
        %347 = vmatpush1.msra.mxu0 0.0
        %348 = vmatprep.subr.mxu0 0.0
        %349 = vmatpush1.msra.mxu0 0.0
        %350 = vmatprep.subr.mxu0 0.0
        %351 = vmatpush1.msra.mxu0 0.0
        %352 = vmatprep.subr.mxu0 0.0
        %353 = vmatpush1.msra.mxu0 0.0
        %354 = vmatprep.subr.mxu0 0.0
        %355 = vmatpush1.msra.mxu0 0.0
        %356 = vmatprep.subr.mxu0 0.0
        %357 = vmatpush1.msra.mxu0 0.0
        %358 = vmatprep.subr.mxu0 0.0
        %359 = vmatpush1.msra.mxu0 0.0
        %360 = vmatprep.subr.mxu0 0.0
        %361 = vmatpush1.msra.mxu0 0.0
        %362 = vmatprep.subr.mxu0 0.0
        %363 = vmatpush1.msra.mxu0 0.0
        %364 = vmatprep.subr.mxu0 0.0
        %365 = vmatpush1.msra.mxu0 0.0
        %366 = vmatprep.subr.mxu0 0.0
        %367 = vmatpush1.msra.mxu0 0.0
        %368 = vmatprep.subr.mxu0 0.0
        %369 = vmatpush1.msra.mxu0 0.0
        %370 = vmatprep.subr.mxu0 0.0
        %371 = vmatpush1.msra.mxu0 0.0
        %372 = vmatprep.subr.mxu0 0.0
        %373 = vmatpush1.msra.mxu0 0.0
        %374 = vmatprep.subr.mxu0 0.0
        %375 = vmatpush1.msra.mxu0 0.0
        %376 = vmatprep.subr.mxu0 0.0
        %377 = vmatpush1.msra.mxu0 0.0
        %378 = vmatprep.subr.mxu0 0.0
        %379 = vmatpush1.msra.mxu0 0.0
        %380 = vmatprep.subr.mxu0 0.0
        %381 = vmatpush1.msra.mxu0 0.0
        %382 = vmatprep.subr.mxu0 0.0
        %383 = vmatpush1.msra.mxu0 0.0
        %384 = vmatprep.subr.mxu0 0.0
        %385 = vmatpush1.msra.mxu0 0.0
        %386 = vmatprep.mubr.f32.mxu0 0.0
        %387 = vmatmul.mubr.f32.gmra.mrb[0].mxu0 %v320
        %v388 = vpop.f32.mrb[0].mxu0
        %v389 = vadd.f32 %v316, %v388
        %v390 = vpop.f32.mrb[0].mxu0
        %391 = vdwg.mxu0
        %v392 = vld [vmem:[#allocation7] sm:$0xff]
        %v393 = vld [vmem:[#allocation7 + $0x8] sm:$0xff]
        %v394 = vld [vmem:[#allocation7 + $0x10] sm:$0xff]
        %v395 = vld [vmem:[#allocation7 + $0x18] sm:$0xff]
        %v396 = vld [vmem:[#allocation7 + $0x20] sm:$0xff]
        %v397 = vld [vmem:[#allocation7 + $0x28] sm:$0xff]
        %v398 = vld [vmem:[#allocation7 + $0x30] sm:$0xff]
        %v399 = vld [vmem:[#allocation7 + $0x38] sm:$0xff]
        %v400 = vld [vmem:[%s4] sm:$0x1]
        %v402 = vlaneseq
        %v403 = vshrl.u32 %v402, 7
        %v404 = vsub.s32 0, %v403
        %v405 = vrot.slane %v400, %v404
        %v408 = vsel %vm318, %v389, 0
        %410 = vmatprep.subr.mxu0 0.0
        %411 = vmatpush1.msra.mxu0 %v392
        %412 = vmatprep.subr.mxu0 0.0
        %413 = vmatpush1.msra.mxu0 %v393
        %414 = vmatprep.subr.mxu0 0.0
        %415 = vmatpush1.msra.mxu0 %v394
        %416 = vmatprep.subr.mxu0 0.0
        %417 = vmatpush1.msra.mxu0 %v395
        %418 = vmatprep.subr.mxu0 0.0
        %419 = vmatpush1.msra.mxu0 %v396
        %420 = vmatprep.subr.mxu0 0.0
        %421 = vmatpush1.msra.mxu0 %v397
        %422 = vmatprep.subr.mxu0 0.0
        %423 = vmatpush1.msra.mxu0 %v398
        %424 = vmatprep.subr.mxu0 0.0
        %425 = vmatpush1.msra.mxu0 %v399
        %426 = vmatprep.subr.mxu0 0.0
        %427 = vmatpush1.msra.mxu0 0.0
        %428 = vmatprep.subr.mxu0 0.0
        %429 = vmatpush1.msra.mxu0 0.0
        %430 = vmatprep.subr.mxu0 0.0
        %431 = vmatpush1.msra.mxu0 0.0
        %432 = vmatprep.subr.mxu0 0.0
        %433 = vmatpush1.msra.mxu0 0.0
        %434 = vmatprep.subr.mxu0 0.0
        %435 = vmatpush1.msra.mxu0 0.0
        %436 = vmatprep.subr.mxu0 0.0
        %437 = vmatpush1.msra.mxu0 0.0
        %438 = vmatprep.subr.mxu0 0.0
        %439 = vmatpush1.msra.mxu0 0.0
        %440 = vmatprep.subr.mxu0 0.0
        %441 = vmatpush1.msra.mxu0 0.0
        %442 = vmatprep.subr.mxu0 0.0
        %443 = vmatpush1.msra.mxu0 0.0
        %444 = vmatprep.subr.mxu0 0.0
        %445 = vmatpush1.msra.mxu0 0.0
        %446 = vmatprep.subr.mxu0 0.0
        %447 = vmatpush1.msra.mxu0 0.0
        %448 = vmatprep.subr.mxu0 0.0
        %449 = vmatpush1.msra.mxu0 0.0
        %450 = vmatprep.subr.mxu0 0.0
        %451 = vmatpush1.msra.mxu0 0.0
        %452 = vmatprep.subr.mxu0 0.0
        %453 = vmatpush1.msra.mxu0 0.0
        %454 = vmatprep.subr.mxu0 0.0
        %455 = vmatpush1.msra.mxu0 0.0
        %456 = vmatprep.subr.mxu0 0.0
        %457 = vmatpush1.msra.mxu0 0.0
        %458 = vmatprep.subr.mxu0 0.0
        %459 = vmatpush1.msra.mxu0 0.0
        %460 = vmatprep.subr.mxu0 0.0
        %461 = vmatpush1.msra.mxu0 0.0
        %462 = vmatprep.subr.mxu0 0.0
        %463 = vmatpush1.msra.mxu0 0.0
        %464 = vmatprep.subr.mxu0 0.0
        %465 = vmatpush1.msra.mxu0 0.0
        %466 = vmatprep.subr.mxu0 0.0
        %467 = vmatpush1.msra.mxu0 0.0
        %468 = vmatprep.subr.mxu0 0.0
        %469 = vmatpush1.msra.mxu0 0.0
        %470 = vmatprep.subr.mxu0 0.0
        %471 = vmatpush1.msra.mxu0 0.0
        %472 = vmatprep.subr.mxu0 0.0
        %473 = vmatpush1.msra.mxu0 0.0
        %474 = vmatprep.mubr.f32.mxu0 0.0
        %475 = vmatmul.mubr.f32.gmra.mrb[0].mxu0 %v408
        %v476 = vpop.f32.mrb[0].mxu0
        %v477 = vadd.f32 %v405, %v476
        %v478 = vpop.f32.mrb[0].mxu0
        %479 = vdwg.mxu0
        %480 = vst [vmem:[%s301] sm:$0x3f] %v477
        %p481 = scmp.lt.s32.totalorder %s21, 7
        %s482 = scalar_select %p481, %s21, 7
        %s483 = smul.addr %s482, 8
        %s484 = scalar_lea.vmem %s5, %s483
        // Predicated region
        $region57: #{tpu_custom_call.1} parent=39 // pred_check
          %p485 = pneg %p154
        $region58: #{tpu_custom_call.1} parent=39 // pred_check_branch
          %487 = sbr.rel (%p485) target = $region60
        $region59: #{tpu_custom_call.1} parent=39 // pred_region
          _
        $region60: #{tpu_custom_call.1} parent=39 // pred_fallthru
          _
      $region40: #{tpu_custom_call.1} parent=5 // pred_fallthru
        _
      %p488 = scmp.le.s32.totalorder 2, %s16
      // Predicated region
      $region61: #{tpu_custom_call.1} parent=5 // pred_check
        %p489 = pneg %p488
      $region62: #{tpu_custom_call.1} parent=5 // pred_check_branch
        %491 = sbr.rel (%p489) target = $region64
      $region63: #{tpu_custom_call.1} parent=5 // pred_region
        %s492 = ssub.s32 %s16, 2
        // Predicated region
        $region65: #{tpu_custom_call.1} parent=63 // pred_check
          %p493 = pneg %p160
        $region66: #{tpu_custom_call.1} parent=63 // pred_check_branch
          %495 = sbr.rel (%p493) target = $region68
        $region67: #{tpu_custom_call.1} parent=63 // pred_region
          %p496 = scmp.lt.s32.totalorder %s22, 7
          %s497 = scalar_select %p496, %s22, 7
          %s498 = smul.addr %s497, 8
          %s499 = scalar_lea.vmem %s5, %s498
        $region68: #{tpu_custom_call.1} parent=63 // pred_fallthru
          _
      $region64: #{tpu_custom_call.1} parent=5 // pred_fallthru
        _
    $region6: #{tpu_custom_call.1} parent=1 // loop_footer
      %s20 = sadd.s32 1, %s16
    $region7: #{tpu_custom_call.1} parent=1 // loop_footer_branch
      %15 = sbr.rel target = $region3
    $region8: #{tpu_custom_call.1} parent=1 // loop_exit
      _
    %500 = vsyncpa [#allocation3], 1
    %s501 = scalar_lea.sflag [#allocation3], 1
    %502 = vsyncpa %s501, 1
    %503 = vsyncpa [#allocation5], 1
    %s504 = scalar_lea.sflag [#allocation5], 1
    %505 = vsyncpa %s504, 1
    %506 = vsyncpa [#allocation8], 1

</llo_original>
